<compile_context>
chip_gen: v6e
topology: v6e:2x2x1
jax: 0.10.0
libtpu: 0.0.40
codegen_flags: <defaults>
</compile_context>

<pallas_src>
import jax
import jax.numpy as jnp
from jax.experimental import pallas as pl
from jax.experimental.pallas import tpu as pltpu


def _per_atom_energy_rmse_kernel(pred_ref, true_ref, n_ref, out_ref):
    """sqrt(mean(((pred - true) / n_atoms)^2)) over all S structures.

    pred_ref : VMEM (1, S) f32/native -- predicted total energies
    true_ref : VMEM (1, S) f32/native -- reference total energies
    n_ref    : VMEM (1, S) f32/int32  -- atoms per structure
    out_ref  : SMEM (1, 1) f32        -- scalar loss
    """
    pred = pred_ref[...].astype(jnp.float32)
    true = true_ref[...].astype(jnp.float32)
    n_atoms = n_ref[...].astype(jnp.float32)

    # divide_per_atom on both prediction and label, then squared error.
    diff = (pred - true) / n_atoms
    sq = diff * diff

    s = pred_ref.shape[-1]                         # compile-time constant
    mse = jnp.sum(sq) / jnp.float32(s)             # MSELoss(reduction='mean')
    out_ref[0, 0] = jnp.sqrt(mse)                  # RMSE = sqrt(MSE)


def per_atom_energy_loss(pred_energy: jax.Array,
                         true_energy: jax.Array,
                         n_atoms: jax.Array) -> jax.Array:
    """PerAtomEnergyLoss('energy', RMSE()) forward.

    pred_energy : [S] predicted total energy per structure
    true_energy : [S] reference total energy per structure
    n_atoms     : [S] number of atoms per structure (int or float)
    returns     : scalar f32 loss
    """
    S = pred_energy.shape[0]

    # Metadata-only reshapes to (1, S); no stacking, no padding, no casts.
    pred2d = pred_energy.reshape(1, S)
    true2d = true_energy.reshape(1, S)
    n2d = n_atoms.reshape(1, S)

    bytes_in = (pred2d.size * pred2d.dtype.itemsize
                + true2d.size * true2d.dtype.itemsize
                + n2d.size * n2d.dtype.itemsize)
    cost = pl.CostEstimate(
        flops=5 * S + 2,          # sub, div, mul, reduce-add (~2/elem), mean
        transcendentals=1,        # sqrt
        bytes_accessed=bytes_in + 4,
    )

    out = pl.pallas_call(
        _per_atom_energy_rmse_kernel,
        in_specs=[
            pl.BlockSpec(memory_space=pltpu.MemorySpace.VMEM),   # pred
            pl.BlockSpec(memory_space=pltpu.MemorySpace.VMEM),   # true
            pl.BlockSpec(memory_space=pltpu.MemorySpace.VMEM),   # n_atoms
        ],
        out_specs=pl.BlockSpec(memory_space=pltpu.MemorySpace.SMEM),
        out_shape=jax.ShapeDtypeStruct((1, 1), jnp.float32),
        cost_estimate=cost,
    )(pred2d, true2d, n2d)

    return out[0, 0]


def _reference(pred_energy, true_energy, n_atoms):
    d = (pred_energy.astype(jnp.float32) - true_energy.astype(jnp.float32))
    d = d / n_atoms.astype(jnp.float32)
    return jnp.sqrt(jnp.mean(d * d))


if __name__ == "__main__":
    key = jax.random.PRNGKey(0)
    k1, k2 = jax.random.split(key, 2)

    # small batch of 2 structures (e.g. 5 and 12 atoms)
    S = 2
    n_atoms = jnp.array([5, 12], dtype=jnp.int32)
    true_energy = jax.random.normal(k1, (S,), jnp.float32) * 10.0
    pred_energy = true_energy + 0.1 * jax.random.normal(k2, (S,), jnp.float32)

    loss = per_atom_energy_loss(pred_energy, true_energy, n_atoms)
    loss = jax.block_until_ready(loss)

    ref = _reference(pred_energy, true_energy, n_atoms)
    assert jnp.allclose(loss, ref, rtol=1e-5, atol=1e-6), (loss, ref)

    print("KERNEL_OK")
</pallas_src>

<mosaic_0001>
module attributes {stable_mosaic.version = 11 : i64} {
  func.func @_per_atom_energy_rmse_kernel(%arg0: memref<1x2xf32, #tpu.memory_space<vmem>>, %arg1: memref<1x2xf32, #tpu.memory_space<vmem>>, %arg2: memref<1x2xi32, #tpu.memory_space<vmem>>, %arg3: memref<1x1xf32, #tpu.memory_space<smem>>) attributes {dimension_semantics = [], scalar_prefetch = 0 : i64, scratch_operands = 0 : i64, tpu.core_type = #tpu.core_type<tc>} {
    %c0 = arith.constant 0 : index
    %c0_0 = arith.constant 0 : index
    %0 = vector.load %arg0[%c0, %c0_0] : memref<1x2xf32, #tpu.memory_space<vmem>>, vector<1x2xf32>
    %c0_1 = arith.constant 0 : index
    %c0_2 = arith.constant 0 : index
    %1 = vector.load %arg1[%c0_1, %c0_2] : memref<1x2xf32, #tpu.memory_space<vmem>>, vector<1x2xf32>
    %c0_3 = arith.constant 0 : index
    %c0_4 = arith.constant 0 : index
    %2 = vector.load %arg2[%c0_3, %c0_4] : memref<1x2xi32, #tpu.memory_space<vmem>>, vector<1x2xi32>
    %3 = arith.sitofp %2 : vector<1x2xi32> to vector<1x2xf32>
    %4 = arith.subf %0, %1 : vector<1x2xf32>
    %5 = arith.divf %4, %3 : vector<1x2xf32>
    %6 = arith.mulf %5, %5 : vector<1x2xf32>
    %7 = vector.shape_cast %6 : vector<1x2xf32> to vector<1x1x2xf32>
    %cst = arith.constant dense<0.000000e+00> : vector<1xf32>
    %8 = vector.multi_reduction <add>, %7, %cst [1, 2] : vector<1x1x2xf32> to vector<1xf32>
    %9 = vector.shape_cast %8 : vector<1xf32> to vector<1x1x1xf32>
    %10 = vector.extract %9[0, 0, 0] : f32 from vector<1x1x1xf32>
    %cst_5 = arith.constant 2.000000e+00 : f32
    %11 = arith.divf %10, %cst_5 : f32
    %12 = math.sqrt %11 : f32
    %c0_6 = arith.constant 0 : index
    %c0_7 = arith.constant 0 : index
    %13 = memref.load %arg3[%c0_6, %c0_7] : memref<1x1xf32, #tpu.memory_space<smem>>
    memref.store %12, %arg3[%c0_6, %c0_7] : memref<1x1xf32, #tpu.memory_space<smem>>
    return
  }
}

</mosaic_0001>

<llo_original>
// kernel: tpu_custom_call.1
$region0: #{tpu_custom_call.1}
  #allocation0 [shape = 'u32[]', space=smem, size = 0x4, offset = 0x4, fixed_abs, tag = 'smem constant byte address 0x4 - core index']
  #allocation1 [shape = 'u32[144,128]{1,0:T(1,128)}', space=vmem, size = 0x12000, scoped, tag = 'internal scratch']
  %s0 = inlined_call_operand.hbm [shape: f32[1,2], index: 0, kind: input, shape index: {}]
  %s1 = inlined_call_operand.vmem [shape: f32[1,2], index: 1, kind: input, shape index: {}]
  %s2 = inlined_call_operand.vmem [shape: s32[1,2], index: 2, kind: input, shape index: {}]
  %s3 = inlined_call_operand.hbm [shape: f32[1,1], index: 3, kind: output, shape index: {}]
  %s4 = sld [smem:[#allocation0]]
  $region26: #{tpu_custom_call.1} parent=0
    _
  %s6 = ssub.s32 1, %s4
  %s7 = scalar_select 0, %s6, %s4
  $region1: #{tpu_custom_call.1} parent=0
    #allocation2 [shape = 'u8[512]{0}', space=vmem, size = 0x400, scoped, tag = 'input window, operand 0, single buffered']
    #allocation3 [shape = 's32[1]{0}', space=sflag, size = 0x4, scoped, tag = 'scoped memory for tpu_custom_call.1']
    #allocation4 [shape = 's32[1]{0}', space=sflag, size = 0x4, scoped, tag = 'scoped memory for tpu_custom_call.1']
    #allocation5 [shape = 'u8[512]{0}', space=smem, size = 0x200, scoped, tag = 'output window, operand 0, single buffered']
    %8 = vsyncpa [#allocation3], 0
    %9 = vsyncpa [#allocation4], 0
    // Predicated region
    $region2: #{tpu_custom_call.1} parent=1 // pred_check
      _
    $region3: #{tpu_custom_call.1} parent=1 // pred_check_branch
      %11 = sbr.rel (0) target = $region5
    $region4: #{tpu_custom_call.1} parent=1 // pred_region
      %s13 = ssub.s32 16, 16
      %14 = vsyncadd [#allocation3], %s13
      %s16 = sshll.u32 [#allocation2], 4
      %s17 = int_to_ptr.vmem [resolvable:$true] %s16
      %19 = dma.hbm_to_vmem [thread:$0]  %s0, 16, %s17, [#allocation3]
    $region5: #{tpu_custom_call.1} parent=1 // pred_fallthru
      _
    // Predicated region
    $region6: #{tpu_custom_call.1} parent=1 // pred_check
      _
    $region7: #{tpu_custom_call.1} parent=1 // pred_check_branch
      %21 = sbr.rel (0) target = $region9
    $region8: #{tpu_custom_call.1} parent=1 // pred_region
      _
    $region9: #{tpu_custom_call.1} parent=1 // pred_fallthru
      _
    // Predicated region
    $region10: #{tpu_custom_call.1} parent=1 // pred_check
      _
    $region11: #{tpu_custom_call.1} parent=1 // pred_check_branch
      %23 = sbr.rel (0) target = $region13
    $region12: #{tpu_custom_call.1} parent=1 // pred_region
      _
    $region13: #{tpu_custom_call.1} parent=1 // pred_fallthru
      _
    // Predicated region
    $region14: #{tpu_custom_call.1} parent=1 // pred_check
      _
    $region15: #{tpu_custom_call.1} parent=1 // pred_check_branch
      %25 = sbr.rel (0) target = $region17
    $region16: #{tpu_custom_call.1} parent=1 // pred_region
      %26 = dma.done [#allocation3], 16
    $region17: #{tpu_custom_call.1} parent=1 // pred_fallthru
      _
    %v27 = vld [vmem:[#allocation2] sm:$0x1]
    %v28 = vld [vmem:[%s1] sm:$0x1]
    %v29 = vld [vmem:[%s2] sm:$0x1]
    %v30 = vcvt.s32.f32 %v29
    %v31 = vsub.f32 %v27, %v28
    %v32 = vrcp.pop %v30
    %v33 = vmul.f32 %v31, %v32
    %v34 = vmul.f32 %v33, %v33
    %vm35 = vcmask 8192
    %v36 = vsel %vm35, %v34, 0.0
    %37 = vadd.xlane.f32.xlu0 %v36
    %v38 = vpop.xlane.xlu0 %37
    %v39 = vrot.slane %v38, 4
    %v40 = vadd.f32 %v38, %v39
    %v41 = vrot.slane %v40, 2
    %v42 = vadd.f32 %v40, %v41
    %v43 = vrot.slane %v42, 1
    %v44 = vadd.f32 %v42, %v43
    %s45 = vtos %v44
    %v46 = vrcp.pop 2.0
    %s47 = vtos %v46
    %s48 = smul.f32 %s45, %s47
    %v49 = vstv %s48
    %v50 = vrsqrt.pop %v49
    %v51 = vmul.f32 %v49, %v50
    %vm52 = vcmp.eq.f32.partialorder %v49, inf
    %v53 = vsel %vm52, %v49, %v51
    %vm54 = vcmp.eq.f32.partialorder %v49, 0.0
    %v55 = vand.u32 %v49, 2147483648
    %v56 = vsel %vm54, %v55, %v53
    %s57 = vtos %v56
    %s58 = scalar_lea.smem [#allocation5], 0
    %59 = sst [smem:[%s58]] %s57
    // Predicated region
    $region18: #{tpu_custom_call.1} parent=1 // pred_check
      _
    $region19: #{tpu_custom_call.1} parent=1 // pred_check_branch
      %61 = sbr.rel (0) target = $region21
    $region20: #{tpu_custom_call.1} parent=1 // pred_region
      %s63 = ssub.s32 16, 16
      %64 = vsyncadd [#allocation4], %s63
      %67 = dma.smem_to_hbm [#allocation5], 16, %s3, [#allocation4]
    $region21: #{tpu_custom_call.1} parent=1 // pred_fallthru
      _
    // Predicated region
    $region22: #{tpu_custom_call.1} parent=1 // pred_check
      _
    $region23: #{tpu_custom_call.1} parent=1 // pred_check_branch
      %69 = sbr.rel (0) target = $region25
    $region24: #{tpu_custom_call.1} parent=1 // pred_region
      %70 = dma.done [#allocation4], 16
    $region25: #{tpu_custom_call.1} parent=1 // pred_fallthru
      _
    %71 = sfence
    %72 = vsyncpa [#allocation3], 1
    %73 = vsyncpa [#allocation4], 1

</llo_original>
